<compile_context>
chip_gen: v7x
topology: tpu7x:2x2x1
jax: 0.10.0
libtpu: 0.0.40
codegen_flags: <defaults>
</compile_context>

<pallas_src>
import functools

import jax
import jax.numpy as jnp
from jax.experimental import pallas as pl
from jax.experimental.pallas import tpu as pltpu


def _round_up(x: int, m: int) -> int:
    return (x + m - 1) // m * m


def _pad2(a, rows, cols, dtype):
    a = a.astype(dtype)
    return jnp.pad(a, ((0, rows - a.shape[0]), (0, cols - a.shape[1])))


def _vmem_capacity_bytes() -> int:
    """Per-core VMEM capacity; conservative fallback (v7x = 64 MiB)."""
    try:
        info = pltpu.get_tpu_info()
        for name in ("vmem_capacity_bytes", "vmem_size_bytes"):
            cap = getattr(info, name, None)
            if cap:
                return int(cap)
    except Exception:
        pass
    return 64 * 1024 * 1024


def _choose_tiling(tm_cap, n_rows, h_pad, o_pad, x_bytes, out_bytes, budget):
    """Largest multiple-of-8 row tile that fits the VMEM budget, with the tile
    rebalanced so row-padding waste is < 8 rows per tile."""
    # Weights & biases are single-buffered (pl.Buffered(1)).
    weight_bytes = 2 * h_pad * h_pad * 2 + h_pad * o_pad * 2 + (h_pad + o_pad) * 4
    # Per-row VMEM: double-buffered x/out pipeline tiles + in-kernel temporaries.
    per_row = (2 * (2 * h_pad) * x_bytes        # x tile, 2 pipeline buffers
               + 2 * o_pad * out_bytes          # out tile, 2 pipeline buffers
               + (2 * h_pad) * 2                # in-kernel bf16 copy of x
               + 5 * h_pad * 4                  # logits/f_att/(v-l)/blended f32 temps
               + o_pad * 4)                     # f32 y before the output cast
    # TODO(synk): for very large hidden sizes (weight_bytes > budget) add a
    # grid axis over the hidden/output columns instead of letting tm collapse.
    tm_vmem = max(8, (budget - weight_bytes) // per_row)
    tm = max(8, min(int(tm_cap), int(tm_vmem), _round_up(n_rows, 8)))
    tm = (tm // 8) * 8
    grid_m = -(-n_rows // tm)                   # cdiv
    # Rebalance so the total padding waste is < 8 rows per tile.
    tm = _round_up(-(-n_rows // grid_m), 8)
    return tm, grid_m, grid_m * tm


def attn_linear_kernel(x_ref, wa_ref, ba_ref, wc_ref, bc_ref, o_ref):
    """One row-tile: fused gating matmul -> sigmoid -> f32 blend -> classifier."""
    hp = wa_ref.shape[1]                                   # H_pad (static)
    x = x_ref[...]                                         # (TM, 2*Hp), input dtype
    x_bf = x.astype(jnp.bfloat16)                          # in-register cast -> MXU

    # x @ W_att^T as ONE contraction with K = 2*Hp (W_att^T stacked row-wise).
    logits = (jnp.dot(x_bf, wa_ref[...], preferred_element_type=jnp.float32)
              + ba_ref[...])                               # (TM, Hp) f32
    f_att = jax.nn.sigmoid(logits)                         # EUP, f32

    xf = x.astype(jnp.float32)
    v = xf[:, :hp]                                         # lane-aligned slices
    l = xf[:, hp:]
    blended = l + f_att * (v - l)                          # == f*v + (1-f)*l, f32

    y = (jnp.dot(blended.astype(jnp.bfloat16), wc_ref[...],
                 preferred_element_type=jnp.float32)
         + bc_ref[...])                                    # (TM, Op) f32
    o_ref[...] = y.astype(o_ref.dtype)


@functools.partial(jax.jit, static_argnames=("tm", "out_dtype"))
def attn_linear(features, w_att, b_att, w_cls, b_cls, *,
                tm=4096, out_dtype=jnp.float32):
    """features: [B, T, input_size] -> [B, T, output_size].

    w_att: (hidden, input) torch layout; b_att: (hidden,)
    w_cls: (output, hidden) torch layout; b_cls: (output,)
    """
    B, T, D = features.shape
    H = w_att.shape[0]
    O = w_cls.shape[0]
    assert H * 2 == D, "gating requires hidden_size == input_size // 2"

    N = B * T
    H_pad = _round_up(H, 128)
    O_pad = _round_up(O, 128)
    x_bytes = features.dtype.itemsize
    out_bytes = jnp.dtype(out_dtype).itemsize

    vmem_cap = _vmem_capacity_bytes()
    vmem_limit = (vmem_cap * 3) // 4            # ~48 MiB on v7x, ~96 MiB on v5e/v6e
    budget = (vmem_limit * 7) // 10             # headroom for compiler scratch
    tm_eff, grid_m, N_pad = _choose_tiling(tm, N, H_pad, O_pad,
                                           x_bytes, out_bytes, budget)

    x = features.reshape(N, D)
    col_pad = H_pad - H
    row_pad = N_pad - N
    if col_pad:
        # Fallback for lane-misaligned H: split + zero-pad each half (one copy).
        x_in = jnp.concatenate(
            [_pad2(x[:, :H], N_pad, H_pad, x.dtype),
             _pad2(x[:, H:], N_pad, H_pad, x.dtype)], axis=1)
    elif row_pad:
        x_in = jnp.pad(x, ((0, row_pad), (0, 0)))
    else:
        x_in = x                                # zero-copy: kernel reads x directly

    w_att_t = jnp.transpose(w_att)              # (D, H)
    if col_pad:
        wa = jnp.concatenate(
            [_pad2(w_att_t[:H], H_pad, H_pad, jnp.bfloat16),
             _pad2(w_att_t[H:], H_pad, H_pad, jnp.bfloat16)], axis=0)
    else:
        wa = w_att_t.astype(jnp.bfloat16)       # (2*H_pad, H_pad)
    ba = _pad2(b_att.reshape(1, H), 1, H_pad, jnp.float32)
    wc = _pad2(jnp.transpose(w_cls), H_pad, O_pad, jnp.bfloat16)
    bc = _pad2(b_cls.reshape(1, O), 1, O_pad, jnp.float32)

    cost = pl.CostEstimate(
        flops=2 * N_pad * (2 * H_pad * H_pad + H_pad * O_pad) + 6 * N_pad * H_pad,
        transcendentals=2 * N_pad * H_pad,      # sigmoid ~ exp + reciprocal
        bytes_accessed=(N_pad * 2 * H_pad * x_bytes + N_pad * O_pad * out_bytes
                        + 2 * H_pad * H_pad * 2 + H_pad * O_pad * 2
                        + (H_pad + O_pad) * 4),
    )

    const = lambda i: (0, 0)
    out = pl.pallas_call(
        attn_linear_kernel,
        out_shape=jax.ShapeDtypeStruct((N_pad, O_pad), out_dtype),
        grid_spec=pltpu.PrefetchScalarGridSpec(
            num_scalar_prefetch=0,
            grid=(grid_m,),
            in_specs=[
                pl.BlockSpec((tm_eff, 2 * H_pad), lambda i: (i, 0)),   # x row-tile
                pl.BlockSpec((2 * H_pad, H_pad), const,
                             pipeline_mode=pl.Buffered(1)),            # W_att (stacked)
                pl.BlockSpec((1, H_pad), const,
                             pipeline_mode=pl.Buffered(1)),            # b_att
                pl.BlockSpec((H_pad, O_pad), const,
                             pipeline_mode=pl.Buffered(1)),            # W_cls
                pl.BlockSpec((1, O_pad), const,
                             pipeline_mode=pl.Buffered(1)),            # b_cls
            ],
            out_specs=pl.BlockSpec((tm_eff, O_pad), lambda i: (i, 0)),
        ),
        compiler_params=pltpu.CompilerParams(
            dimension_semantics=("parallel",),
            vmem_limit_bytes=int(vmem_limit),
        ),
        cost_estimate=cost,
    )(x_in, wa, ba, wc, bc)

    if row_pad or O_pad != O:
        out = out[:N, :O]
    return out.reshape(B, T, O)


def attn_linear_ref(features, w_att, b_att, w_cls, b_cls):
    """Pure-JAX f32 reference matching the PyTorch forward exactly."""
    f_att = jax.nn.sigmoid(features @ w_att.T + b_att)
    h = features.shape[-1] // 2
    v, l = features[..., :h], features[..., h:]
    blended = f_att * v + (1.0 - f_att) * l
    return blended @ w_cls.T + b_cls


def attn_linear_ref_bf16ops(features, w_att, b_att, w_cls, b_cls):
    """Reference mimicking the kernel's bf16 matmul-operand quantization
    (f32 blend, f32 accumulation) for a tight numerical check."""
    q = lambda a: a.astype(jnp.bfloat16).astype(jnp.float32)
    logits = q(features) @ q(w_att).T + b_att
    f_att = jax.nn.sigmoid(logits)
    h = features.shape[-1] // 2
    v, l = features[..., :h], features[..., h:]
    blended = l + f_att * (v - l)
    return q(blended) @ q(w_cls).T + b_cls


def _run_case(B, T, input_size, hidden_size, output_size, seed,
              out_dtype=jnp.float32):
    key = jax.random.PRNGKey(seed)
    k_x, k_wa, k_ba, k_wc, k_bc = jax.random.split(key, 5)

    features = jax.random.normal(k_x, (B, T, input_size), dtype=jnp.float32)
    lim_a = 1.0 / jnp.sqrt(jnp.float32(input_size))
    lim_c = 1.0 / jnp.sqrt(jnp.float32(hidden_size))
    w_att = jax.random.uniform(k_wa, (hidden_size, input_size),
                               minval=-lim_a, maxval=lim_a, dtype=jnp.float32)
    b_att = jax.random.uniform(k_ba, (hidden_size,),
                               minval=-lim_a, maxval=lim_a, dtype=jnp.float32)
    w_cls = jax.random.uniform(k_wc, (output_size, hidden_size),
                               minval=-lim_c, maxval=lim_c, dtype=jnp.float32)
    b_cls = jax.random.uniform(k_bc, (output_size,),
                               minval=-lim_c, maxval=lim_c, dtype=jnp.float32)

    out = jax.block_until_ready(
        attn_linear(features, w_att, b_att, w_cls, b_cls, out_dtype=out_dtype))
    assert out.shape == (B, T, output_size)
    assert out.dtype == jnp.dtype(out_dtype)
    out_f32 = out.astype(jnp.float32)

    # Semantics check vs the true f32 module (relaxed: bf16 matmul operands).
    ref = attn_linear_ref(features, w_att, b_att, w_cls, b_cls)
    relaxed = 5e-2 if out_dtype == jnp.float32 else 7e-2
    assert jnp.allclose(out_f32, ref, atol=relaxed, rtol=relaxed)
    # Tight check vs the quantization-matched reference.
    ref_q = attn_linear_ref_bf16ops(features, w_att, b_att, w_cls, b_cls)
    tight = 2e-3 if out_dtype == jnp.float32 else 2e-2
    assert jnp.allclose(out_f32, ref_q, atol=tight, rtol=tight)


if __name__ == "__main__":
    # Small shape consistent with the module: input_size=32 -> hidden=16,
    # output=24 (exercises the lane-misaligned fallback pad path).
    _run_case(B=2, T=8, input_size=32, hidden_size=16, output_size=24, seed=0)
    # H already lane-aligned (zero-copy x path needs only row padding 111->112),
    # output columns padded.
    _run_case(B=3, T=37, input_size=256, hidden_size=128, output_size=96, seed=1)
    # Fully aligned case, zero-copy input and bf16 output (halved output traffic).
    _run_case(B=2, T=64, input_size=256, hidden_size=128, output_size=128, seed=2,
              out_dtype=jnp.bfloat16)
    print("KERNEL_OK")
</pallas_src>

<mosaic_0001>
module attributes {stable_mosaic.version = 11 : i64} {
  func.func @attn_linear_kernel(%arg0: i32, %arg1: memref<16x256xf32, #tpu.memory_space<vmem>>, %arg2: memref<256x128xbf16, #tpu.memory_space<vmem>>, %arg3: memref<1x128xf32, #tpu.memory_space<vmem>>, %arg4: memref<128x128xbf16, #tpu.memory_space<vmem>>, %arg5: memref<1x128xf32, #tpu.memory_space<vmem>>, %arg6: memref<16x128xf32, #tpu.memory_space<vmem>>) attributes {dimension_semantics = [#tpu.dimension_semantics<parallel>], iteration_bounds = array<i64: 1>, scalar_prefetch = 0 : i64, scratch_operands = 0 : i64, tpu.core_type = #tpu.core_type<tc>, window_params = [{transform_indices = @transform_0, window_bounds = array<i64: 16, 256>}, {pipeline_mode = #tpu.pipeline_mode<synchronous>, transform_indices = @transform_1, window_bounds = array<i64: 256, 128>}, {pipeline_mode = #tpu.pipeline_mode<synchronous>, transform_indices = @transform_2, window_bounds = array<i64: 1, 128>}, {pipeline_mode = #tpu.pipeline_mode<synchronous>, transform_indices = @transform_3, window_bounds = array<i64: 128, 128>}, {pipeline_mode = #tpu.pipeline_mode<synchronous>, transform_indices = @transform_4, window_bounds = array<i64: 1, 128>}, {transform_indices = @transform_5, window_bounds = array<i64: 16, 128>}]} {
    %c0 = arith.constant 0 : index
    %c0_0 = arith.constant 0 : index
    %0 = vector.load %arg1[%c0, %c0_0] : memref<16x256xf32, #tpu.memory_space<vmem>>, vector<16x256xf32>
    %1 = arith.truncf %0 : vector<16x256xf32> to vector<16x256xbf16>
    %c0_1 = arith.constant 0 : index
    %c0_2 = arith.constant 0 : index
    %2 = vector.load %arg2[%c0_1, %c0_2] : memref<256x128xbf16, #tpu.memory_space<vmem>>, vector<256x128xbf16>
    %cst = arith.constant dense<0.000000e+00> : vector<16x128xf32>
    %3 = tpu.matmul %1, %2, %cst {dimension_numbers = #tpu.dot_dimension_numbers<[1], [0], [0], [1], [0, 0, 1, 1], [], []>} : vector<16x256xbf16>, vector<256x128xbf16>, vector<16x128xf32> -> vector<16x128xf32>
    %c0_3 = arith.constant 0 : index
    %c0_4 = arith.constant 0 : index
    %4 = vector.load %arg3[%c0_3, %c0_4] : memref<1x128xf32, #tpu.memory_space<vmem>>, vector<1x128xf32>
    %5 = vector.broadcast %4 : vector<1x128xf32> to vector<16x128xf32>
    %6 = arith.addf %3, %5 : vector<16x128xf32>
    %7 = arith.negf %6 : vector<16x128xf32>
    %8 = math.exp %7 : vector<16x128xf32>
    %cst_5 = arith.constant 1.000000e+00 : f32
    %9 = vector.broadcast %cst_5 : f32 to vector<16x128xf32>
    %10 = arith.addf %9, %8 : vector<16x128xf32>
    %11 = arith.divf %9, %10 : vector<16x128xf32>
    %12 = vector.extract_strided_slice %0 {offsets = [0, 0], sizes = [16, 128], strides = [1, 1]} : vector<16x256xf32> to vector<16x128xf32>
    %13 = vector.extract_strided_slice %0 {offsets = [0, 128], sizes = [16, 128], strides = [1, 1]} : vector<16x256xf32> to vector<16x128xf32>
    %14 = arith.subf %12, %13 : vector<16x128xf32>
    %15 = arith.mulf %11, %14 : vector<16x128xf32>
    %16 = arith.addf %13, %15 : vector<16x128xf32>
    %17 = arith.truncf %16 : vector<16x128xf32> to vector<16x128xbf16>
    %c0_6 = arith.constant 0 : index
    %c0_7 = arith.constant 0 : index
    %18 = vector.load %arg4[%c0_6, %c0_7] : memref<128x128xbf16, #tpu.memory_space<vmem>>, vector<128x128xbf16>
    %cst_8 = arith.constant dense<0.000000e+00> : vector<16x128xf32>
    %19 = tpu.matmul %17, %18, %cst_8 {dimension_numbers = #tpu.dot_dimension_numbers<[1], [0], [0], [1], [0, 0, 1, 1], [], []>} : vector<16x128xbf16>, vector<128x128xbf16>, vector<16x128xf32> -> vector<16x128xf32>
    %c0_9 = arith.constant 0 : index
    %c0_10 = arith.constant 0 : index
    %20 = vector.load %arg5[%c0_9, %c0_10] : memref<1x128xf32, #tpu.memory_space<vmem>>, vector<1x128xf32>
    %21 = vector.broadcast %20 : vector<1x128xf32> to vector<16x128xf32>
    %22 = arith.addf %19, %21 : vector<16x128xf32>
    %c0_11 = arith.constant 0 : index
    %c0_12 = arith.constant 0 : index
    %23 = vector.load %arg6[%c0_11, %c0_12] : memref<16x128xf32, #tpu.memory_space<vmem>>, vector<16x128xf32>
    tpu.vector_store %arg6[%c0_11, %c0_12], %22 {strides = array<i32>} : memref<16x128xf32, #tpu.memory_space<vmem>>, vector<16x128xf32>,
    return
  }
  func.func @transform_0(%arg0: i32) -> (i32, i32) {
    %c0_i32 = arith.constant 0 : i32
    %c0_i32_0 = arith.constant 0 : i32
    return %arg0, %c0_i32 : i32, i32
  }
  func.func @transform_1(%arg0: i32) -> (i32, i32) {
    %c0_i32 = arith.constant 0 : i32
    %c0_i32_0 = arith.constant 0 : i32
    %c0_i32_1 = arith.constant 0 : i32
    return %c0_i32, %c0_i32_0 : i32, i32
  }
  func.func @transform_2(%arg0: i32) -> (i32, i32) {
    %c0_i32 = arith.constant 0 : i32
    %c0_i32_0 = arith.constant 0 : i32
    %c0_i32_1 = arith.constant 0 : i32
    return %c0_i32, %c0_i32_0 : i32, i32
  }
  func.func @transform_3(%arg0: i32) -> (i32, i32) {
    %c0_i32 = arith.constant 0 : i32
    %c0_i32_0 = arith.constant 0 : i32
    %c0_i32_1 = arith.constant 0 : i32
    return %c0_i32, %c0_i32_0 : i32, i32
  }
  func.func @transform_4(%arg0: i32) -> (i32, i32) {
    %c0_i32 = arith.constant 0 : i32
    %c0_i32_0 = arith.constant 0 : i32
    %c0_i32_1 = arith.constant 0 : i32
    return %c0_i32, %c0_i32_0 : i32, i32
  }
  func.func @transform_5(%arg0: i32) -> (i32, i32) {
    %c0_i32 = arith.constant 0 : i32
    %c0_i32_0 = arith.constant 0 : i32
    return %arg0, %c0_i32 : i32, i32
  }
}

</mosaic_0001>

<llo_original>
// kernel: attn_linear.1
$region0: #{attn_linear.1}
  #allocation0 [shape = 'u32[]', space=smem, size = 0x4, offset = 0x4, fixed_abs, tag = 'smem constant byte address 0x4 - core index']
  #allocation1 [shape = 'u32[144,128]{1,0:T(1,128)}', space=vmem, size = 0x12000, scoped, tag = 'internal scratch']
  %s0 = inlined_call_operand.vmem [shape: f32[16,256], index: 0, kind: input, shape index: {}]
  %s1 = inlined_call_operand.vmem [shape: bf16[256,128], index: 1, kind: input, shape index: {}]
  %s2 = inlined_call_operand.vmem [shape: f32[1,128], index: 2, kind: input, shape index: {}]
  %s3 = inlined_call_operand.vmem [shape: bf16[128,128], index: 3, kind: input, shape index: {}]
  %s4 = inlined_call_operand.vmem [shape: f32[1,128], index: 4, kind: input, shape index: {}]
  %s5 = inlined_call_operand.vmem [shape: f32[16,128], index: 5, kind: output, shape index: {}]
  %s6 = sld [smem:[#allocation0]]
  $region30: #{attn_linear.1} parent=0
    _
  %s8 = ssub.s32 1, %s6
  %s9 = scalar_select 0, %s8, %s6
  // Predicated region
  $region2: #{attn_linear.1} parent=0 // pred_check
    _
  $region3: #{attn_linear.1} parent=0 // pred_check_branch
    %11 = sbr.rel (0) target = $region5
  $region4: #{attn_linear.1} parent=0 // pred_region
    _
  $region5: #{attn_linear.1} parent=0 // pred_fallthru
    _
  // Predicated region
  $region6: #{attn_linear.1} parent=0 // pred_check
    _
  $region7: #{attn_linear.1} parent=0 // pred_check_branch
    %13 = sbr.rel (0) target = $region9
  $region8: #{attn_linear.1} parent=0 // pred_region
    _
  $region9: #{attn_linear.1} parent=0 // pred_fallthru
    _
  // Predicated region
  $region10: #{attn_linear.1} parent=0 // pred_check
    _
  $region11: #{attn_linear.1} parent=0 // pred_check_branch
    %15 = sbr.rel (0) target = $region13
  $region12: #{attn_linear.1} parent=0 // pred_region
    _
  $region13: #{attn_linear.1} parent=0 // pred_fallthru
    _
  // Predicated region
  $region14: #{attn_linear.1} parent=0 // pred_check
    _
  $region15: #{attn_linear.1} parent=0 // pred_check_branch
    %17 = sbr.rel (0) target = $region17
  $region16: #{attn_linear.1} parent=0 // pred_region
    _
  $region17: #{attn_linear.1} parent=0 // pred_fallthru
    _
  // Predicated region
  $region18: #{attn_linear.1} parent=0 // pred_check
    _
  $region19: #{attn_linear.1} parent=0 // pred_check_branch
    %19 = sbr.rel (0) target = $region21
  $region20: #{attn_linear.1} parent=0 // pred_region
    _
  $region21: #{attn_linear.1} parent=0 // pred_fallthru
    _
  %v21 = vld [vmem:[%s0] sm:$0xff]
  %v22 = vld [vmem:[%s0 + $0x8] sm:$0xff]
  %v23 = vld [vmem:[%s0 + $0x10] sm:$0xff]
  %v24 = vld [vmem:[%s0 + $0x18] sm:$0xff]
  %v25 = vpack.c.bf16 %v23, %v21
  %v26 = vpack.c.bf16 %v24, %v22
  %v27 = vld [vmem:[%s1] sm:$0xf]
  %v28 = vld [vmem:[%s1 + $0x4] sm:$0xf]
  %v29 = vld [vmem:[%s1 + $0x8] sm:$0xf]
  %v30 = vld [vmem:[%s1 + $0xc] sm:$0xf]
  %v31 = vld [vmem:[%s1 + $0x10] sm:$0xf]
  %v32 = vld [vmem:[%s1 + $0x14] sm:$0xf]
  %v33 = vld [vmem:[%s1 + $0x18] sm:$0xf]
  %v34 = vld [vmem:[%s1 + $0x1c] sm:$0xf]
  %v35 = vld [vmem:[%s1 + $0x20] sm:$0xf]
  %v36 = vld [vmem:[%s1 + $0x24] sm:$0xf]
  %v37 = vld [vmem:[%s1 + $0x28] sm:$0xf]
  %v38 = vld [vmem:[%s1 + $0x2c] sm:$0xf]
  %v39 = vld [vmem:[%s1 + $0x30] sm:$0xf]
  %v40 = vld [vmem:[%s1 + $0x34] sm:$0xf]
  %v41 = vld [vmem:[%s1 + $0x38] sm:$0xf]
  %v42 = vld [vmem:[%s1 + $0x3c] sm:$0xf]
  %v43 = vld [vmem:[%s1 + $0x40] sm:$0xf]
  %v44 = vld [vmem:[%s1 + $0x44] sm:$0xf]
  %v45 = vld [vmem:[%s1 + $0x48] sm:$0xf]
  %v46 = vld [vmem:[%s1 + $0x4c] sm:$0xf]
  %v47 = vld [vmem:[%s1 + $0x50] sm:$0xf]
  %v48 = vld [vmem:[%s1 + $0x54] sm:$0xf]
  %v49 = vld [vmem:[%s1 + $0x58] sm:$0xf]
  %v50 = vld [vmem:[%s1 + $0x5c] sm:$0xf]
  %v51 = vld [vmem:[%s1 + $0x60] sm:$0xf]
  %v52 = vld [vmem:[%s1 + $0x64] sm:$0xf]
  %v53 = vld [vmem:[%s1 + $0x68] sm:$0xf]
  %v54 = vld [vmem:[%s1 + $0x6c] sm:$0xf]
  %v55 = vld [vmem:[%s1 + $0x70] sm:$0xf]
  %v56 = vld [vmem:[%s1 + $0x74] sm:$0xf]
  %v57 = vld [vmem:[%s1 + $0x78] sm:$0xf]
  %v58 = vld [vmem:[%s1 + $0x7c] sm:$0xf]
  %v59 = vld [vmem:[%s2] sm:$0x1]
  %v61 = vlaneseq
  %v62 = vshrl.u32 %v61, 7
  %v63 = vsub.s32 0, %v62
  %v64 = vrot.slane %v59, %v63
  %v98 = vunpack.c.l.b16 %v27
  %v99 = vunpack.c.l.b16 %v28
  %v100 = vunpack.c.l.b16 %v29
  %v101 = vunpack.c.l.b16 %v30
  %v102 = vunpack.c.l.b16 %v31
  %v103 = vunpack.c.l.b16 %v32
  %v104 = vunpack.c.l.b16 %v33
  %v105 = vunpack.c.l.b16 %v34
  %v106 = vunpack.c.l.b16 %v35
  %v107 = vunpack.c.l.b16 %v36
  %v108 = vunpack.c.l.b16 %v37
  %v109 = vunpack.c.l.b16 %v38
  %v110 = vunpack.c.l.b16 %v39
  %v111 = vunpack.c.l.b16 %v40
  %v112 = vunpack.c.l.b16 %v41
  %v113 = vunpack.c.l.b16 %v42
  %v114 = vunpack.c.l.b16 %v43
  %v115 = vunpack.c.l.b16 %v44
  %v116 = vunpack.c.l.b16 %v45
  %v117 = vunpack.c.l.b16 %v46
  %v118 = vunpack.c.l.b16 %v47
  %v119 = vunpack.c.l.b16 %v48
  %v120 = vunpack.c.l.b16 %v49
  %v121 = vunpack.c.l.b16 %v50
  %v122 = vunpack.c.l.b16 %v51
  %v123 = vunpack.c.l.b16 %v52
  %v124 = vunpack.c.l.b16 %v53
  %v125 = vunpack.c.l.b16 %v54
  %v126 = vunpack.c.l.b16 %v55
  %v127 = vunpack.c.l.b16 %v56
  %v128 = vunpack.c.l.b16 %v57
  %v129 = vunpack.c.l.b16 %v58
  %v130 = vpack.c.b16 %v99, %v98
  %v131 = vpack.c.b16 %v101, %v100
  %v132 = vpack.c.b16 %v103, %v102
  %v133 = vpack.c.b16 %v105, %v104
  %v134 = vpack.c.b16 %v107, %v106
  %v135 = vpack.c.b16 %v109, %v108
  %v136 = vpack.c.b16 %v111, %v110
  %v137 = vpack.c.b16 %v113, %v112
  %v138 = vpack.c.b16 %v115, %v114
  %v139 = vpack.c.b16 %v117, %v116
  %v140 = vpack.c.b16 %v119, %v118
  %v141 = vpack.c.b16 %v121, %v120
  %v142 = vpack.c.b16 %v123, %v122
  %v143 = vpack.c.b16 %v125, %v124
  %v144 = vpack.c.b16 %v127, %v126
  %v145 = vpack.c.b16 %v129, %v128
  %162 = vmatprep.subr.bf16.mxu0 0
  %163 = vmatpush1.bf16.msra.mxu0 %v130
  %164 = vmatprep.subr.bf16.mxu0 0
  %165 = vmatpush1.bf16.msra.mxu0 %v131
  %166 = vmatprep.subr.bf16.mxu0 0
  %167 = vmatpush1.bf16.msra.mxu0 %v132
  %168 = vmatprep.subr.bf16.mxu0 0
  %169 = vmatpush1.bf16.msra.mxu0 %v133
  %170 = vmatprep.subr.bf16.mxu0 0
  %171 = vmatpush1.bf16.msra.mxu0 %v134
  %172 = vmatprep.subr.bf16.mxu0 0
  %173 = vmatpush1.bf16.msra.mxu0 %v135
  %174 = vmatprep.subr.bf16.mxu0 0
  %175 = vmatpush1.bf16.msra.mxu0 %v136
  %176 = vmatprep.subr.bf16.mxu0 0
  %177 = vmatpush1.bf16.msra.mxu0 %v137
  %178 = vmatprep.subr.bf16.mxu0 0
  %179 = vmatpush1.bf16.msra.mxu0 %v138
  %180 = vmatprep.subr.bf16.mxu0 0
  %181 = vmatpush1.bf16.msra.mxu0 %v139
  %182 = vmatprep.subr.bf16.mxu0 0
  %183 = vmatpush1.bf16.msra.mxu0 %v140
  %184 = vmatprep.subr.bf16.mxu0 0
  %185 = vmatpush1.bf16.msra.mxu0 %v141
  %186 = vmatprep.subr.bf16.mxu0 0
  %187 = vmatpush1.bf16.msra.mxu0 %v142
  %188 = vmatprep.subr.bf16.mxu0 0
  %189 = vmatpush1.bf16.msra.mxu0 %v143
  %190 = vmatprep.subr.bf16.mxu0 0
  %191 = vmatpush1.bf16.msra.mxu0 %v144
  %192 = vmatprep.subr.bf16.mxu0 0
  %193 = vmatpush1.bf16.msra.mxu0 %v145
  %194 = vmatprep.mubr.bf16.mxu0 %v26
  %195 = vmatmul.mubr.bf16.gmra.mrb[0].mxu0 %v25
  %v196 = vpop.f32.mrb[0].mxu0
  %v197 = vadd.f32 %v64, %v196
  %v198 = vpop.f32.mrb[0].mxu0
  %v199 = vpop.f32.mrb[0].mxu0
  %v200 = vadd.f32 %v64, %v199
  %v201 = vpop.f32.mrb[0].mxu0
  %202 = vdwg.mxu0
  %v203 = vxor.u32 %v197, 2147483648
  %v204 = vxor.u32 %v200, 2147483648
  %v205 = vmul.f32 %v203, 1.442695
  %v206 = vpow.pop %v205
  %v207 = vmul.f32 %v204, 1.442695
  %v208 = vpow.pop %v207
  %v209 = vadd.f32 %v206, 1.0
  %v210 = vadd.f32 %v208, 1.0
  %v211 = vrcp.pop %v209
  %v212 = vmul.f32 1.0, %v211
  %v213 = vrcp.pop %v210
  %v214 = vmul.f32 1.0, %v213
  %v215 = vsub.f32 %v21, %v22
  %v216 = vsub.f32 %v23, %v24
  %v217 = vmul.f32 %v212, %v215
  %v218 = vmul.f32 %v214, %v216
  %v219 = vadd.f32 %v22, %v217
  %v220 = vadd.f32 %v24, %v218
  %v221 = vpack.c.bf16 %v220, %v219
  %v222 = vld [vmem:[%s3] sm:$0xf]
  %v223 = vld [vmem:[%s3 + $0x4] sm:$0xf]
  %v224 = vld [vmem:[%s3 + $0x8] sm:$0xf]
  %v225 = vld [vmem:[%s3 + $0xc] sm:$0xf]
  %v226 = vld [vmem:[%s3 + $0x10] sm:$0xf]
  %v227 = vld [vmem:[%s3 + $0x14] sm:$0xf]
  %v228 = vld [vmem:[%s3 + $0x18] sm:$0xf]
  %v229 = vld [vmem:[%s3 + $0x1c] sm:$0xf]
  %v230 = vld [vmem:[%s3 + $0x20] sm:$0xf]
  %v231 = vld [vmem:[%s3 + $0x24] sm:$0xf]
  %v232 = vld [vmem:[%s3 + $0x28] sm:$0xf]
  %v233 = vld [vmem:[%s3 + $0x2c] sm:$0xf]
  %v234 = vld [vmem:[%s3 + $0x30] sm:$0xf]
  %v235 = vld [vmem:[%s3 + $0x34] sm:$0xf]
  %v236 = vld [vmem:[%s3 + $0x38] sm:$0xf]
  %v237 = vld [vmem:[%s3 + $0x3c] sm:$0xf]
  %v238 = vld [vmem:[%s4] sm:$0x1]
  %v240 = vlaneseq
  %v241 = vshrl.u32 %v240, 7
  %v242 = vsub.s32 0, %v241
  %v243 = vrot.slane %v238, %v242
  %v261 = vunpack.c.l.b16 %v222
  %v262 = vunpack.c.l.b16 %v223
  %v263 = vunpack.c.l.b16 %v224
  %v264 = vunpack.c.l.b16 %v225
  %v265 = vunpack.c.l.b16 %v226
  %v266 = vunpack.c.l.b16 %v227
  %v267 = vunpack.c.l.b16 %v228
  %v268 = vunpack.c.l.b16 %v229
  %v269 = vunpack.c.l.b16 %v230
  %v270 = vunpack.c.l.b16 %v231
  %v271 = vunpack.c.l.b16 %v232
  %v272 = vunpack.c.l.b16 %v233
  %v273 = vunpack.c.l.b16 %v234
  %v274 = vunpack.c.l.b16 %v235
  %v275 = vunpack.c.l.b16 %v236
  %v276 = vunpack.c.l.b16 %v237
  %v277 = vpack.c.b16 %v262, %v261
  %v278 = vpack.c.b16 %v264, %v263
  %v279 = vpack.c.b16 %v266, %v265
  %v280 = vpack.c.b16 %v268, %v267
  %v281 = vpack.c.b16 %v270, %v269
  %v282 = vpack.c.b16 %v272, %v271
  %v283 = vpack.c.b16 %v274, %v273
  %v284 = vpack.c.b16 %v276, %v275
  %293 = vmatprep.subr.bf16.mxu0 0
  %294 = vmatpush1.bf16.msra.mxu0 %v277
  %295 = vmatprep.subr.bf16.mxu0 0
  %296 = vmatpush1.bf16.msra.mxu0 %v278
  %297 = vmatprep.subr.bf16.mxu0 0
  %298 = vmatpush1.bf16.msra.mxu0 %v279
  %299 = vmatprep.subr.bf16.mxu0 0
  %300 = vmatpush1.bf16.msra.mxu0 %v280
  %301 = vmatprep.subr.bf16.mxu0 0
  %302 = vmatpush1.bf16.msra.mxu0 %v281
  %303 = vmatprep.subr.bf16.mxu0 0
  %304 = vmatpush1.bf16.msra.mxu0 %v282
  %305 = vmatprep.subr.bf16.mxu0 0
  %306 = vmatpush1.bf16.msra.mxu0 %v283
  %307 = vmatprep.subr.bf16.mxu0 0
  %308 = vmatpush1.bf16.msra.mxu0 %v284
  %309 = vmatprep.subr.bf16.mxu0 0
  %310 = vmatpush1.bf16.msra.mxu0 0
  %311 = vmatprep.subr.bf16.mxu0 0
  %312 = vmatpush1.bf16.msra.mxu0 0
  %313 = vmatprep.subr.bf16.mxu0 0
  %314 = vmatpush1.bf16.msra.mxu0 0
  %315 = vmatprep.subr.bf16.mxu0 0
  %316 = vmatpush1.bf16.msra.mxu0 0
  %317 = vmatprep.subr.bf16.mxu0 0
  %318 = vmatpush1.bf16.msra.mxu0 0
  %319 = vmatprep.subr.bf16.mxu0 0
  %320 = vmatpush1.bf16.msra.mxu0 0
  %321 = vmatprep.subr.bf16.mxu0 0
  %322 = vmatpush1.bf16.msra.mxu0 0
  %323 = vmatprep.subr.bf16.mxu0 0
  %324 = vmatpush1.bf16.msra.mxu0 0
  %325 = vmatprep.mubr.bf16.mxu0 0
  %326 = vmatmul.mubr.bf16.gmra.mrb[0].mxu0 %v221
  %v327 = vpop.f32.mrb[0].mxu0
  %v328 = vadd.f32 %v243, %v327
  %v329 = vpop.f32.mrb[0].mxu0
  %v330 = vpop.f32.mrb[0].mxu0
  %v331 = vadd.f32 %v243, %v330
  %v332 = vpop.f32.mrb[0].mxu0
  %333 = vdwg.mxu0
  %334 = vst [vmem:[%s5] sm:$0xff] %v328
  %335 = vst [vmem:[%s5 + $0x8] sm:$0xff] %v331
  // Predicated region
  $region22: #{attn_linear.1} parent=0 // pred_check
    _
  $region23: #{attn_linear.1} parent=0 // pred_check_branch
    %337 = sbr.rel (0) target = $region25
  $region24: #{attn_linear.1} parent=0 // pred_region
    _
  $region25: #{attn_linear.1} parent=0 // pred_fallthru
    _
  // Predicated region
  $region26: #{attn_linear.1} parent=0 // pred_check
    _
  $region27: #{attn_linear.1} parent=0 // pred_check_branch
    %339 = sbr.rel (0) target = $region29
  $region28: #{attn_linear.1} parent=0 // pred_region
    _
  $region29: #{attn_linear.1} parent=0 // pred_fallthru
    _

</llo_original>
